<compile_context>
chip_gen: v7x
topology: tpu7x:2x2x1
jax: 0.10.0
libtpu: 0.0.40
codegen_flags: <defaults>
</compile_context>

<pallas_src>
import jax
import jax.numpy as jnp
from jax.experimental import pallas as pl
from jax.experimental.pallas import tpu as pltpu


def _xpr_kernel(scale_ref, f1_ref, f2_ref, f3_ref, f4_ref, out_ref, smap_ref):
    """Grid = (a, b_tile).

    scale_ref : (D,)            float32, SMEM
    f*_ref    : (1, h, w)       float32, raw Model outputs of depth plane `a`
    out_ref   : (1, db, h, 4w)  float32, last axis ordered [r, 2q + c]
    smap_ref  : (h, 4w)         float32 VMEM scratch (sqrt map of plane `a`)
    """
    b_tile = pl.program_id(1)
    db = out_ref.shape[1]
    h = f3_ref.shape[1]
    w = f3_ref.shape[2]

    # The sqrt / interleave map depends only on `a`: compute it once per plane.
    @pl.when(b_tile == 0)
    def _():
        a1 = jnp.abs(f1_ref[0])
        a2 = jnp.abs(f2_ref[0])
        a3 = jnp.abs(f3_ref[0])
        a4 = jnp.abs(f4_ref[0])

        zrow = jnp.zeros((1, w), jnp.float32)
        zcol = jnp.zeros((h, 1), jnp.float32)
        # shift-by-one with zero fill (mirrors the F.pad + [1:] slicing)
        a1_r = jnp.concatenate([a1[1:, :], zrow], axis=0)      # A1[p+1, q]
        a2_r = jnp.concatenate([a2[1:, :], zrow], axis=0)      # A2[p+1, q]
        a1_c = jnp.concatenate([a1[:, 1:], zcol], axis=1)      # A1[p, q+1]
        a4_c = jnp.concatenate([a4[:, 1:], zcol], axis=1)      # A4[p, q+1]
        a1_rc = jnp.concatenate([a1_r[:, 1:], zcol], axis=1)   # A1[p+1, q+1]

        a2sq = a2 * a2
        a3sq = a3 * a3
        a4sq = a4 * a4
        # The 1/4 inside the sqrt is folded into the (0.5 * scale[b]) scalar.
        s00 = jnp.sqrt(a1 * a1 + a2sq + a3sq + a4sq)                      # (0,0)
        s01 = jnp.sqrt(a1_c * a1_c + a2sq + a3sq + a4_c * a4_c)           # (0,1)
        s10 = jnp.sqrt(a1_r * a1_r + a2_r * a2_r + a3sq + a4sq)           # (1,0)
        s11 = jnp.sqrt(a1_rc * a1_rc + a2_r * a2_r + a3sq + a4_c * a4_c)  # (1,1)

        # Lane interleave on the MXU (exact: one nonzero per output column):
        #   e_r[p, 2q + c] = s_rc[p, q]
        q_idx = jax.lax.broadcasted_iota(jnp.int32, (w, 2 * w), 0)
        j_idx = jax.lax.broadcasted_iota(jnp.int32, (w, 2 * w), 1)
        p_even = (j_idx == 2 * q_idx).astype(jnp.float32)        # (w, 2w)
        p_odd = (j_idx == 2 * q_idx + 1).astype(jnp.float32)

        e0 = (jnp.dot(s00, p_even, preferred_element_type=jnp.float32)
              + jnp.dot(s01, p_odd, preferred_element_type=jnp.float32))
        e1 = (jnp.dot(s10, p_even, preferred_element_type=jnp.float32)
              + jnp.dot(s11, p_odd, preferred_element_type=jnp.float32))

        smap_ref[:, : 2 * w] = e0      # rows 2p   of the full-res plane (r=0)
        smap_ref[:, 2 * w:] = e1       # rows 2p+1 of the full-res plane (r=1)

    # Scale and store the b-tile; lane-dense (h, 4w) stores.
    for j in range(db):                          # db is small & static
        b = b_tile * db + j                      # global output-depth index
        out_ref[0, j] = (0.5 * scale_ref[b]) * smap_ref[...]


def _pick_b_tile(depth, out_row_bytes, budget_bytes=8 << 20):
    """Largest divisor of `depth` whose double-buffered out block fits budget."""
    db = max(1, min(depth, budget_bytes // max(1, 2 * out_row_bytes)))
    while depth % db:
        db -= 1
    return db


def xpr_forward(cgh_l_u, cgh_u, cgh, cgh_l, scale_factor, model_fn, res_target):
    """Pallas implementation of XPR_Model.forward() -> (D, D, H, W)."""
    H, W = res_target
    h, w = H // 2, W // 2
    wout = 2 * W                       # = 4w; kernel output row = [r, 2q+c]

    # External `Model` call (glue — the Model itself is not part of this module)
    f1 = model_fn(cgh_l_u).astype(jnp.float32)   # (D, h, w)
    f2 = model_fn(cgh_u).astype(jnp.float32)
    f3 = model_fn(cgh).astype(jnp.float32)
    f4 = model_fn(cgh_l).astype(jnp.float32)
    depth = f1.shape[0]
    scale = scale_factor.reshape(depth).astype(jnp.float32)

    out_row_bytes = h * wout * 4
    db = _pick_b_tile(depth, out_row_bytes)
    nb = depth // db

    # Explicit VMEM budget: double-buffered inputs + output block, plus scratch.
    vmem_bytes = (2 * (4 * h * w * 4)            # four (1,h,w) f32 inputs x2
                  + 2 * (db * out_row_bytes)     # output block x2
                  + out_row_bytes                # scratch sqrt map
                  + (4 << 20))                   # headroom
    vmem_limit = int(min(64 << 20, max(vmem_bytes, 32 << 20)))

    out = pl.pallas_call(
        _xpr_kernel,
        out_shape=jax.ShapeDtypeStruct((depth, depth, h, wout), jnp.float32),
        grid=(depth, nb),
        in_specs=[
            pl.BlockSpec(memory_space=pltpu.MemorySpace.SMEM),      # scale (D,)
            pl.BlockSpec((1, h, w), lambda a, b: (a, 0, 0)),
            pl.BlockSpec((1, h, w), lambda a, b: (a, 0, 0)),
            pl.BlockSpec((1, h, w), lambda a, b: (a, 0, 0)),
            pl.BlockSpec((1, h, w), lambda a, b: (a, 0, 0)),
        ],
        out_specs=pl.BlockSpec((1, db, h, wout), lambda a, b: (a, b, 0, 0)),
        scratch_shapes=[pltpu.VMEM((h, wout), jnp.float32)],
        compiler_params=pltpu.CompilerParams(
            dimension_semantics=("parallel", "arbitrary"),
            vmem_limit_bytes=vmem_limit),
    )(scale, f1, f2, f3, f4)

    # (D, D, h, 4w) -> (D, D, H, W): identical row-major offsets, so this is a
    # zero-cost metadata reshape (no second HBM pass, unlike a transpose).
    return out.reshape(depth, depth, H, W)


def make_synthetic_model(depth_num, key):
    # TODO(synk): the real `Model` (e.g. FFT/ASM wave-propagation network) is an
    # external constructor argument in the PyTorch code; replaced here with a
    # deterministic per-depth elementwise surrogate (1, h, w) -> (depth, h, w).
    k1, k2 = jax.random.split(key)
    alpha = jax.random.normal(k1, (depth_num,), jnp.float32)
    beta = jax.random.normal(k2, (depth_num,), jnp.float32)

    def model_fn(cgh_phase):              # cgh_phase: (1, h, w)
        p = cgh_phase[0]
        return (alpha[:, None, None] * jnp.sin(p)[None]
                + beta[:, None, None] * jnp.cos(p)[None])
    return model_fn


def xpr_reference(cgh_l_u, cgh_u, cgh, cgh_l, scale_factor, model_fn, res_target):
    """Pure-JAX mirror of the PyTorch forward (for verification)."""
    def amp_up(x):
        a = jnp.abs(model_fn(x))[:, None]                        # (D, 1, h, w)
        return jnp.repeat(jnp.repeat(a, 2, axis=2), 2, axis=3)   # nearest 2x

    A1, A2, A3, A4 = amp_up(cgh_l_u), amp_up(cgh_u), amp_up(cgh), amp_up(cgh_l)
    A1p = jnp.pad(A1, ((0, 0), (0, 0), (0, 1), (0, 1)))
    A2p = jnp.pad(A2, ((0, 0), (0, 0), (0, 1), (0, 0)))
    A4p = jnp.pad(A4, ((0, 0), (0, 0), (0, 0), (0, 1)))
    val = jnp.sqrt((A1p[:, :, 1:, 1:] ** 2 + A2p[:, :, 1:, :] ** 2
                    + A3 ** 2 + A4p[:, :, :, 1:] ** 2) / 4.0)
    # (D,1,1) * (D,1,H,W) -> (D,D,H,W): identical broadcast to PyTorch
    return scale_factor * val


if __name__ == "__main__":
    res_target = (16, 256)      # full (H, W); CGH parameters live at (H//2, W//2)
    depth_num = 2
    H, W = res_target
    h, w = H // 2, W // 2

    key = jax.random.PRNGKey(0)
    k_cgh, k_model = jax.random.split(key)
    ks = jax.random.split(k_cgh, 4)

    # xavier_uniform-style deterministic init of the CGH parameter planes
    limit = (6.0 / (h * w + w)) ** 0.5
    cgh_l_u = jax.random.uniform(ks[0], (1, h, w), jnp.float32, -limit, limit)
    cgh_u   = jax.random.uniform(ks[1], (1, h, w), jnp.float32, -limit, limit)
    cgh_p   = jax.random.uniform(ks[2], (1, h, w), jnp.float32, -limit, limit)
    cgh_l   = jax.random.uniform(ks[3], (1, h, w), jnp.float32, -limit, limit)
    # module inits scale_factor to ones; add a deterministic perturbation so the
    # (D,1,1) x (D,1,H,W) -> (D,D,H,W) broadcast is actually exercised
    scale_factor = (jnp.ones((depth_num, 1, 1), jnp.float32)
                    + 0.1 * jnp.arange(depth_num, dtype=jnp.float32)[:, None, None])

    model_fn = make_synthetic_model(depth_num, k_model)

    fwd = jax.jit(lambda a, b, c, d, s: xpr_forward(
        a, b, c, d, s, model_fn=model_fn, res_target=res_target))
    out = fwd(cgh_l_u, cgh_u, cgh_p, cgh_l, scale_factor)
    out = jax.block_until_ready(out)

    ref = xpr_reference(cgh_l_u, cgh_u, cgh_p, cgh_l, scale_factor,
                        model_fn, res_target)

    assert out.shape == (depth_num, depth_num, H, W), out.shape
    assert jnp.allclose(out, ref, atol=1e-5, rtol=1e-5), \
        float(jnp.max(jnp.abs(out - ref)))
    print("KERNEL_OK")
</pallas_src>

<mosaic_0001>
module attributes {stable_mosaic.version = 11 : i64} {
  func.func @_xpr_kernel(%arg0: i32, %arg1: i32, %arg2: memref<2xf32, #tpu.memory_space<smem>>, %arg3: memref<1x8x128xf32, #tpu.memory_space<vmem>>, %arg4: memref<1x8x128xf32, #tpu.memory_space<vmem>>, %arg5: memref<1x8x128xf32, #tpu.memory_space<vmem>>, %arg6: memref<1x8x128xf32, #tpu.memory_space<vmem>>, %arg7: memref<1x2x8x512xf32, #tpu.memory_space<vmem>>, %arg8: memref<8x512xf32, #tpu.memory_space<vmem>>) attributes {dimension_semantics = [#tpu.dimension_semantics<parallel>, #tpu.dimension_semantics<arbitrary>], iteration_bounds = array<i64: 2, 1>, scalar_prefetch = 0 : i64, scratch_operands = 1 : i64, tpu.core_type = #tpu.core_type<tc>, window_params = [{transform_indices = @transform_0, window_bounds = array<i64: 2>}, {transform_indices = @transform_1, window_bounds = array<i64: 1, 8, 128>}, {transform_indices = @transform_2, window_bounds = array<i64: 1, 8, 128>}, {transform_indices = @transform_3, window_bounds = array<i64: 1, 8, 128>}, {transform_indices = @transform_4, window_bounds = array<i64: 1, 8, 128>}, {transform_indices = @transform_5, window_bounds = array<i64: 1, 2, 8, 512>}]} {
    %c0_i32 = arith.constant 0 : i32
    %0 = arith.cmpi eq, %arg1, %c0_i32 : i32
    %1 = arith.extui %0 : i1 to i32
    %c0_i32_0 = arith.constant 0 : i32
    %2 = arith.cmpi ne, %1, %c0_i32_0 : i32
    scf.if %2 {
      %c0_14 = arith.constant 0 : index
      %c0_15 = arith.constant 0 : index
      %c0_16 = arith.constant 0 : index
      %25 = vector.load %arg3[%c0_14, %c0_15, %c0_16] : memref<1x8x128xf32, #tpu.memory_space<vmem>>, vector<1x8x128xf32>
      %26 = vector.shape_cast %25 : vector<1x8x128xf32> to vector<8x128xf32>
      %27 = math.absf %26 : vector<8x128xf32>
      %c0_17 = arith.constant 0 : index
      %c0_18 = arith.constant 0 : index
      %c0_19 = arith.constant 0 : index
      %28 = vector.load %arg4[%c0_17, %c0_18, %c0_19] : memref<1x8x128xf32, #tpu.memory_space<vmem>>, vector<1x8x128xf32>
      %29 = vector.shape_cast %28 : vector<1x8x128xf32> to vector<8x128xf32>
      %30 = math.absf %29 : vector<8x128xf32>
      %c0_20 = arith.constant 0 : index
      %c0_21 = arith.constant 0 : index
      %c0_22 = arith.constant 0 : index
      %31 = vector.load %arg5[%c0_20, %c0_21, %c0_22] : memref<1x8x128xf32, #tpu.memory_space<vmem>>, vector<1x8x128xf32>
      %32 = vector.shape_cast %31 : vector<1x8x128xf32> to vector<8x128xf32>
      %33 = math.absf %32 : vector<8x128xf32>
      %c0_23 = arith.constant 0 : index
      %c0_24 = arith.constant 0 : index
      %c0_25 = arith.constant 0 : index
      %34 = vector.load %arg6[%c0_23, %c0_24, %c0_25] : memref<1x8x128xf32, #tpu.memory_space<vmem>>, vector<1x8x128xf32>
      %35 = vector.shape_cast %34 : vector<1x8x128xf32> to vector<8x128xf32>
      %36 = math.absf %35 : vector<8x128xf32>
      %cst_26 = arith.constant 0.000000e+00 : f32
      %37 = vector.broadcast %cst_26 : f32 to vector<1x128xf32>
      %cst_27 = arith.constant 0.000000e+00 : f32
      %38 = vector.broadcast %cst_27 : f32 to vector<8x1xf32>
      %39 = vector.extract_strided_slice %27 {offsets = [1, 0], sizes = [7, 128], strides = [1, 1]} : vector<8x128xf32> to vector<7x128xf32>
      %40 = tpu.concatenate %39, %37 in 0 : vector<7x128xf32>, vector<1x128xf32> -> vector<8x128xf32>
      %41 = vector.extract_strided_slice %30 {offsets = [1, 0], sizes = [7, 128], strides = [1, 1]} : vector<8x128xf32> to vector<7x128xf32>
      %42 = tpu.concatenate %41, %37 in 0 : vector<7x128xf32>, vector<1x128xf32> -> vector<8x128xf32>
      %43 = vector.extract_strided_slice %27 {offsets = [0, 1], sizes = [8, 127], strides = [1, 1]} : vector<8x128xf32> to vector<8x127xf32>
      %44 = tpu.concatenate %43, %38 in 1 : vector<8x127xf32>, vector<8x1xf32> -> vector<8x128xf32>
      %45 = vector.extract_strided_slice %36 {offsets = [0, 1], sizes = [8, 127], strides = [1, 1]} : vector<8x128xf32> to vector<8x127xf32>
      %46 = tpu.concatenate %45, %38 in 1 : vector<8x127xf32>, vector<8x1xf32> -> vector<8x128xf32>
      %47 = vector.extract_strided_slice %40 {offsets = [0, 1], sizes = [8, 127], strides = [1, 1]} : vector<8x128xf32> to vector<8x127xf32>
      %48 = tpu.concatenate %47, %38 in 1 : vector<8x127xf32>, vector<8x1xf32> -> vector<8x128xf32>
      %49 = arith.mulf %30, %30 : vector<8x128xf32>
      %50 = arith.mulf %33, %33 : vector<8x128xf32>
      %51 = arith.mulf %36, %36 : vector<8x128xf32>
      %52 = arith.mulf %27, %27 : vector<8x128xf32>
      %53 = arith.addf %52, %49 : vector<8x128xf32>
      %54 = arith.addf %53, %50 : vector<8x128xf32>
      %55 = arith.addf %54, %51 : vector<8x128xf32>
      %56 = math.sqrt %55 : vector<8x128xf32>
      %57 = arith.mulf %44, %44 : vector<8x128xf32>
      %58 = arith.addf %57, %49 : vector<8x128xf32>
      %59 = arith.addf %58, %50 : vector<8x128xf32>
      %60 = arith.mulf %46, %46 : vector<8x128xf32>
      %61 = arith.addf %59, %60 : vector<8x128xf32>
      %62 = math.sqrt %61 : vector<8x128xf32>
      %63 = arith.mulf %40, %40 : vector<8x128xf32>
      %64 = arith.mulf %42, %42 : vector<8x128xf32>
      %65 = arith.addf %63, %64 : vector<8x128xf32>
      %66 = arith.addf %65, %50 : vector<8x128xf32>
      %67 = arith.addf %66, %51 : vector<8x128xf32>
      %68 = math.sqrt %67 : vector<8x128xf32>
      %69 = arith.mulf %48, %48 : vector<8x128xf32>
      %70 = arith.mulf %42, %42 : vector<8x128xf32>
      %71 = arith.addf %69, %70 : vector<8x128xf32>
      %72 = arith.addf %71, %50 : vector<8x128xf32>
      %73 = arith.mulf %46, %46 : vector<8x128xf32>
      %74 = arith.addf %72, %73 : vector<8x128xf32>
      %75 = math.sqrt %74 : vector<8x128xf32>
      %76 = tpu.iota {dimensions = array<i32: 0>} : vector<128x256xi32>
      %77 = tpu.iota {dimensions = array<i32: 1>} : vector<128x256xi32>
      %c2_i32_28 = arith.constant 2 : i32
      %78 = vector.broadcast %c2_i32_28 : i32 to vector<128x256xi32>
      %79 = arith.muli %78, %76 : vector<128x256xi32>
      %80 = arith.cmpi eq, %77, %79 : vector<128x256xi32>
      %81 = arith.extui %80 : vector<128x256xi1> to vector<128x256xi32>
      %82 = arith.sitofp %81 : vector<128x256xi32> to vector<128x256xf32>
      %c2_i32_29 = arith.constant 2 : i32
      %83 = vector.broadcast %c2_i32_29 : i32 to vector<128x256xi32>
      %84 = arith.muli %83, %76 : vector<128x256xi32>
      %c1_i32_30 = arith.constant 1 : i32
      %85 = vector.broadcast %c1_i32_30 : i32 to vector<128x256xi32>
      %86 = arith.addi %84, %85 : vector<128x256xi32>
      %87 = arith.cmpi eq, %77, %86 : vector<128x256xi32>
      %88 = arith.extui %87 : vector<128x256xi1> to vector<128x256xi32>
      %89 = arith.sitofp %88 : vector<128x256xi32> to vector<128x256xf32>
      %cst_31 = arith.constant dense<0.000000e+00> : vector<8x256xf32>
      %90 = tpu.matmul %56, %82, %cst_31 {dimension_numbers = #tpu.dot_dimension_numbers<[1], [0], [0], [1], [0, 0, 1, 1], [], []>} : vector<8x128xf32>, vector<128x256xf32>, vector<8x256xf32> -> vector<8x256xf32>
      %cst_32 = arith.constant dense<0.000000e+00> : vector<8x256xf32>
      %91 = tpu.matmul %62, %89, %cst_32 {dimension_numbers = #tpu.dot_dimension_numbers<[1], [0], [0], [1], [0, 0, 1, 1], [], []>} : vector<8x128xf32>, vector<128x256xf32>, vector<8x256xf32> -> vector<8x256xf32>
      %92 = arith.addf %90, %91 : vector<8x256xf32>
      %cst_33 = arith.constant dense<0.000000e+00> : vector<8x256xf32>
      %93 = tpu.matmul %68, %82, %cst_33 {dimension_numbers = #tpu.dot_dimension_numbers<[1], [0], [0], [1], [0, 0, 1, 1], [], []>} : vector<8x128xf32>, vector<128x256xf32>, vector<8x256xf32> -> vector<8x256xf32>
      %cst_34 = arith.constant dense<0.000000e+00> : vector<8x256xf32>
      %94 = tpu.matmul %75, %89, %cst_34 {dimension_numbers = #tpu.dot_dimension_numbers<[1], [0], [0], [1], [0, 0, 1, 1], [], []>} : vector<8x128xf32>, vector<128x256xf32>, vector<8x256xf32> -> vector<8x256xf32>
      %95 = arith.addf %93, %94 : vector<8x256xf32>
      %c0_35 = arith.constant 0 : index
      %c0_36 = arith.constant 0 : index
      %96 = vector.load %arg8[%c0_35, %c0_36] : memref<8x512xf32, #tpu.memory_space<vmem>>, vector<8x256xf32>
      tpu.vector_store %arg8[%c0_35, %c0_36], %92 {strides = array<i32>} : memref<8x512xf32, #tpu.memory_space<vmem>>, vector<8x256xf32>,
      %c0_37 = arith.constant 0 : index
      %c256 = arith.constant 256 : index
      %97 = vector.load %arg8[%c0_37, %c256] : memref<8x512xf32, #tpu.memory_space<vmem>>, vector<8x256xf32>
      tpu.vector_store %arg8[%c0_37, %c256], %95 {strides = array<i32>} : memref<8x512xf32, #tpu.memory_space<vmem>>, vector<8x256xf32>,
    } else {
    }
    %c2_i32 = arith.constant 2 : i32
    %3 = arith.muli %arg1, %c2_i32 : i32
    %c0_i32_1 = arith.constant 0 : i32
    %4 = arith.addi %3, %c0_i32_1 : i32
    %5 = arith.index_cast %4 : i32 to index
    %6 = memref.load %arg2[%5] : memref<2xf32, #tpu.memory_space<smem>>
    %cst = arith.constant 5.000000e-01 : f32
    %7 = arith.mulf %cst, %6 : f32
    %c0 = arith.constant 0 : index
    %c0_2 = arith.constant 0 : index
    %8 = vector.load %arg8[%c0, %c0_2] : memref<8x512xf32, #tpu.memory_space<vmem>>, vector<8x512xf32>
    %9 = vector.broadcast %7 : f32 to vector<8x512xf32>
    %10 = arith.mulf %9, %8 : vector<8x512xf32>
    %c0_3 = arith.constant 0 : index
    %c0_4 = arith.constant 0 : index
    %c0_5 = arith.constant 0 : index
    %c0_6 = arith.constant 0 : index
    %11 = vector.load %arg7[%c0_3, %c0_4, %c0_5, %c0_6] : memref<1x2x8x512xf32, #tpu.memory_space<vmem>>, vector<1x1x8x512xf32>
    %12 = vector.shape_cast %11 : vector<1x1x8x512xf32> to vector<8x512xf32>
    %13 = vector.shape_cast %10 : vector<8x512xf32> to vector<1x1x8x512xf32>
    tpu.vector_store %arg7[%c0_3, %c0_4, %c0_5, %c0_6], %13 {strides = array<i32>} : memref<1x2x8x512xf32, #tpu.memory_space<vmem>>, vector<1x1x8x512xf32>,
    %c2_i32_7 = arith.constant 2 : i32
    %14 = arith.muli %arg1, %c2_i32_7 : i32
    %c1_i32 = arith.constant 1 : i32
    %15 = arith.addi %14, %c1_i32 : i32
    %16 = arith.index_cast %15 : i32 to index
    %17 = memref.load %arg2[%16] : memref<2xf32, #tpu.memory_space<smem>>
    %cst_8 = arith.constant 5.000000e-01 : f32
    %18 = arith.mulf %cst_8, %17 : f32
    %c0_9 = arith.constant 0 : index
    %c0_10 = arith.constant 0 : index
    %19 = vector.load %arg8[%c0_9, %c0_10] : memref<8x512xf32, #tpu.memory_space<vmem>>, vector<8x512xf32>
    %20 = vector.broadcast %18 : f32 to vector<8x512xf32>
    %21 = arith.mulf %20, %19 : vector<8x512xf32>
    %c0_11 = arith.constant 0 : index
    %c1 = arith.constant 1 : index
    %c0_12 = arith.constant 0 : index
    %c0_13 = arith.constant 0 : index
    %22 = vector.load %arg7[%c0_11, %c1, %c0_12, %c0_13] : memref<1x2x8x512xf32, #tpu.memory_space<vmem>>, vector<1x1x8x512xf32>
    %23 = vector.shape_cast %22 : vector<1x1x8x512xf32> to vector<8x512xf32>
    %24 = vector.shape_cast %21 : vector<8x512xf32> to vector<1x1x8x512xf32>
    tpu.vector_store %arg7[%c0_11, %c1, %c0_12, %c0_13], %24 {strides = array<i32>} : memref<1x2x8x512xf32, #tpu.memory_space<vmem>>, vector<1x1x8x512xf32>,
    return
  }
  func.func @transform_0(%arg0: i32, %arg1: i32) -> i32 {
    %c0_i32 = arith.constant 0 : i32
    %c0_i32_0 = arith.constant 0 : i32
    return %c0_i32 : i32
  }
  func.func @transform_1(%arg0: i32, %arg1: i32) -> (i32, i32, i32) {
    %c0_i32 = arith.constant 0 : i32
    %c0_i32_0 = arith.constant 0 : i32
    %c0_i32_1 = arith.constant 0 : i32
    return %arg0, %c0_i32, %c0_i32_0 : i32, i32, i32
  }
  func.func @transform_2(%arg0: i32, %arg1: i32) -> (i32, i32, i32) {
    %c0_i32 = arith.constant 0 : i32
    %c0_i32_0 = arith.constant 0 : i32
    %c0_i32_1 = arith.constant 0 : i32
    return %arg0, %c0_i32, %c0_i32_0 : i32, i32, i32
  }
  func.func @transform_3(%arg0: i32, %arg1: i32) -> (i32, i32, i32) {
    %c0_i32 = arith.constant 0 : i32
    %c0_i32_0 = arith.constant 0 : i32
    %c0_i32_1 = arith.constant 0 : i32
    return %arg0, %c0_i32, %c0_i32_0 : i32, i32, i32
  }
  func.func @transform_4(%arg0: i32, %arg1: i32) -> (i32, i32, i32) {
    %c0_i32 = arith.constant 0 : i32
    %c0_i32_0 = arith.constant 0 : i32
    %c0_i32_1 = arith.constant 0 : i32
    return %arg0, %c0_i32, %c0_i32_0 : i32, i32, i32
  }
  func.func @transform_5(%arg0: i32, %arg1: i32) -> (i32, i32, i32, i32) {
    %c0_i32 = arith.constant 0 : i32
    %c0_i32_0 = arith.constant 0 : i32
    %c0_i32_1 = arith.constant 0 : i32
    return %arg0, %arg1, %c0_i32, %c0_i32_0 : i32, i32, i32, i32
  }
}

</mosaic_0001>

<llo_original>
// kernel: _lambda_.1
$region0: #{_lambda_.1}
  #allocation0 [shape = 'u32[]', space=smem, size = 0x4, offset = 0x4, fixed_abs, tag = 'smem constant byte address 0x4 - core index']
  #allocation1 [shape = 'u32[144,128]{1,0:T(1,128)}', space=vmem, size = 0x12000, scoped, tag = 'internal scratch']
  #allocation2 [shape = 'f32[8,512]{1,0:T(8,128)}', space=vmem, size = 0x4000, scoped, tag = 'scratch operand']
  %s0 = inlined_call_operand.vmem [shape: f32[2], index: 0, kind: input, shape index: {}]
  %s1 = inlined_call_operand.vmem [shape: f32[2,8,128], index: 1, kind: input, shape index: {}]
  %s2 = inlined_call_operand.vmem [shape: f32[2,8,128], index: 2, kind: input, shape index: {}]
  %s3 = inlined_call_operand.vmem [shape: f32[2,8,128], index: 3, kind: input, shape index: {}]
  %s4 = inlined_call_operand.vmem [shape: f32[2,8,128], index: 4, kind: input, shape index: {}]
  %s5 = inlined_call_operand.vmem [shape: f32[2,2,8,512], index: 5, kind: output, shape index: {}]
  %s6 = sld [smem:[#allocation0]]
  $region61: #{_lambda_.1} parent=0
    _
  %s8 = ssub.s32 1, %s6
  %s9 = scalar_select 0, %s8, %s6
  $region1: #{_lambda_.1} parent=0
    #allocation3 [shape = 'u8[512]{0}', space=smem, size = 0x200, scoped, tag = 'input window, operand 0, single buffered']
    #allocation4 [shape = 's32[2]{0}', space=sflag, size = 0x8, scoped, tag = 'scoped memory for _lambda_.1']
    %10 = vsyncpa [#allocation4], 0
    loop: start=0, step=1, limit=4
    $region2: #{_lambda_.1} parent=1 // loop_pre_header
      _
    $region3: #{_lambda_.1} parent=1 // loop_header
      %s12 = sphi 0, %s16
      %p13 = scmp.ge.s32.totalorder %s12, 4
      %s19 = sphi 0, %s31
      %s20 = sphi 0, %s27
      %s21 = sphi 0, %s19
      %s22 = sphi 0, %s20
      %s23 = sphi 0, %s21
      %s24 = sphi 0, %s22
      %s32 = sphi 0, %s32
      %s34 = sphi 0, %s32
      %s35 = sphi 0, %s34
      %s49 = sphi 0, %s35
      %s55 = sphi 0, %s57
      %s58 = sphi 0, %s55
      %s59 = sphi 0, %s58
      %s75 = sphi 0, %s59
      %s81 = sphi 0, %s83
      %s84 = sphi 0, %s81
      %s85 = sphi 0, %s84
      %s101 = sphi 0, %s85
      %s107 = sphi 0, %s109
      %s110 = sphi 0, %s107
      %s111 = sphi 0, %s110
      %s127 = sphi 0, %s111
      %s133 = sphi 0, %s135
      %s136 = sphi 0, %s133
      %s137 = sphi 0, %s136
      %s153 = sphi 0, %s137
      %s161 = sphi 0, %s163
      %s164 = sphi 0, %s161
      %s165 = sphi 0, %s164
      %s181 = sphi 0, %s165
    $region4: #{_lambda_.1} parent=1 // loop_header_branch
      %15 = sbr.rel (%p13) target = $region8
    $region5: #{_lambda_.1} parent=1 // loop_body
      %s17 = ssub.s32 %s12, 1
      %s18 = ssub.s32 %s12, 2
      %s25 = sadd.s32 1, %s20
      %p26 = scmp.ge.s32.totalorder %s25, 1
      %s27 = scalar_select %p26, 0, %s25
      %s28 = sadd.s32 1, %s19
      %s29 = scalar_select %p26, %s28, %s19
      %p30 = scmp.ge.s32.totalorder %s29, 2
      %s31 = scalar_select %p30, 0, %s29
      %s33 = sadd.s32 %s32, 1
      %p36 = scmp.eq.s32.totalorder %s12, 1
      %p37 = scmp.ne.s32.totalorder %s32, %s34
      %p38 = scmp.eq.s32.totalorder %s12, 0
      %p39 = por %p37, %p38
      %p40 = scmp.ne.s32.totalorder %s32, %s34
      %p41 = scmp.eq.s32.totalorder %s17, 1
      %p42 = por %p40, %p41
      %p43 = scmp.ne.s32.totalorder %s34, %s35
      %p44 = scmp.eq.s32.totalorder %s17, 0
      %p45 = por %p43, %p44
      %p46 = scmp.ne.s32.totalorder %s34, %s35
      %p47 = scmp.eq.s32.totalorder %s18, 1
      %p48 = por %p46, %p47
      %p50 = scmp.ne.s32.totalorder %s35, %s49
      %p51 = scmp.eq.s32.totalorder %s18, 0
      %p52 = por %p50, %p51
      %s53 = ssub.s32 %s19, %s31
      %p54 = scmp.eq.s32.totalorder %s53, 0
      %s56 = sadd.s32 %s55, 1
      %s57 = scalar_select %p54, %s55, %s56
      %p60 = pneg %p54
      %p61 = scmp.eq.s32.totalorder %s12, 1
      %p62 = por %p60, %p61
      %p63 = scmp.ne.s32.totalorder %s55, %s58
      %p64 = scmp.eq.s32.totalorder %s12, 0
      %p65 = por %p63, %p64
      %p66 = scmp.ne.s32.totalorder %s55, %s58
      %p67 = scmp.eq.s32.totalorder %s17, 1
      %p68 = por %p66, %p67
      %p69 = scmp.ne.s32.totalorder %s58, %s59
      %p70 = scmp.eq.s32.totalorder %s17, 0
      %p71 = por %p69, %p70
      %p72 = scmp.ne.s32.totalorder %s58, %s59
      %p73 = scmp.eq.s32.totalorder %s18, 1
      %p74 = por %p72, %p73
      %p76 = scmp.ne.s32.totalorder %s59, %s75
      %p77 = scmp.eq.s32.totalorder %s18, 0
      %p78 = por %p76, %p77
      %s79 = ssub.s32 %s19, %s31
      %p80 = scmp.eq.s32.totalorder %s79, 0
      %s82 = sadd.s32 %s81, 1
      %s83 = scalar_select %p80, %s81, %s82
      %p86 = pneg %p80
      %p87 = scmp.eq.s32.totalorder %s12, 1
      %p88 = por %p86, %p87
      %p89 = scmp.ne.s32.totalorder %s81, %s84
      %p90 = scmp.eq.s32.totalorder %s12, 0
      %p91 = por %p89, %p90
      %p92 = scmp.ne.s32.totalorder %s81, %s84
      %p93 = scmp.eq.s32.totalorder %s17, 1
      %p94 = por %p92, %p93
      %p95 = scmp.ne.s32.totalorder %s84, %s85
      %p96 = scmp.eq.s32.totalorder %s17, 0
      %p97 = por %p95, %p96
      %p98 = scmp.ne.s32.totalorder %s84, %s85
      %p99 = scmp.eq.s32.totalorder %s18, 1
      %p100 = por %p98, %p99
      %p102 = scmp.ne.s32.totalorder %s85, %s101
      %p103 = scmp.eq.s32.totalorder %s18, 0
      %p104 = por %p102, %p103
      %s105 = ssub.s32 %s19, %s31
      %p106 = scmp.eq.s32.totalorder %s105, 0
      %s108 = sadd.s32 %s107, 1
      %s109 = scalar_select %p106, %s107, %s108
      %p112 = pneg %p106
      %p113 = scmp.eq.s32.totalorder %s12, 1
      %p114 = por %p112, %p113
      %p115 = scmp.ne.s32.totalorder %s107, %s110
      %p116 = scmp.eq.s32.totalorder %s12, 0
      %p117 = por %p115, %p116
      %p118 = scmp.ne.s32.totalorder %s107, %s110
      %p119 = scmp.eq.s32.totalorder %s17, 1
      %p120 = por %p118, %p119
      %p121 = scmp.ne.s32.totalorder %s110, %s111
      %p122 = scmp.eq.s32.totalorder %s17, 0
      %p123 = por %p121, %p122
      %p124 = scmp.ne.s32.totalorder %s110, %s111
      %p125 = scmp.eq.s32.totalorder %s18, 1
      %p126 = por %p124, %p125
      %p128 = scmp.ne.s32.totalorder %s111, %s127
      %p129 = scmp.eq.s32.totalorder %s18, 0
      %p130 = por %p128, %p129
      %s131 = ssub.s32 %s19, %s31
      %p132 = scmp.eq.s32.totalorder %s131, 0
      %s134 = sadd.s32 %s133, 1
      %s135 = scalar_select %p132, %s133, %s134
      %p138 = pneg %p132
      %p139 = scmp.eq.s32.totalorder %s12, 1
      %p140 = por %p138, %p139
      %p141 = scmp.ne.s32.totalorder %s133, %s136
      %p142 = scmp.eq.s32.totalorder %s12, 0
      %p143 = por %p141, %p142
      %p144 = scmp.ne.s32.totalorder %s133, %s136
      %p145 = scmp.eq.s32.totalorder %s17, 1
      %p146 = por %p144, %p145
      %p147 = scmp.ne.s32.totalorder %s136, %s137
      %p148 = scmp.eq.s32.totalorder %s17, 0
      %p149 = por %p147, %p148
      %p150 = scmp.ne.s32.totalorder %s136, %s137
      %p151 = scmp.eq.s32.totalorder %s18, 1
      %p152 = por %p150, %p151
      %p154 = scmp.ne.s32.totalorder %s137, %s153
      %p155 = scmp.eq.s32.totalorder %s18, 0
      %p156 = por %p154, %p155
      %s157 = ssub.s32 %s19, %s31
      %s158 = ssub.s32 %s20, %s27
      %s159 = sor.u32 %s157, %s158
      %p160 = scmp.eq.s32.totalorder %s159, 0
      %s162 = sadd.s32 %s161, 1
      %s163 = scalar_select %p160, %s161, %s162
      %p166 = pneg %p160
      %p167 = scmp.eq.s32.totalorder %s12, 1
      %p168 = por %p166, %p167
      %p169 = scmp.ne.s32.totalorder %s161, %s164
      %p170 = scmp.eq.s32.totalorder %s12, 0
      %p171 = por %p169, %p170
      %p172 = scmp.ne.s32.totalorder %s161, %s164
      %p173 = scmp.eq.s32.totalorder %s17, 1
      %p174 = por %p172, %p173
      %p175 = scmp.ne.s32.totalorder %s164, %s165
      %p176 = scmp.eq.s32.totalorder %s17, 0
      %p177 = por %p175, %p176
      %p178 = scmp.ne.s32.totalorder %s164, %s165
      %p179 = scmp.eq.s32.totalorder %s18, 1
      %p180 = por %p178, %p179
      %p182 = scmp.ne.s32.totalorder %s165, %s181
      %p183 = scmp.eq.s32.totalorder %s18, 0
      %p184 = por %p182, %p183
      %p185 = scmp.le.s32.totalorder 1, %s12
      %p186 = scmp.lt.s32.totalorder %s12, 3
      %p187 = pnand %p185, %p186
      %p188 = pneg %p187
      // Predicated region
      $region9: #{_lambda_.1} parent=5 // pred_check
        _
      $region10: #{_lambda_.1} parent=5 // pred_check_branch
        %190 = sbr.rel (%p187) target = $region12
      $region11: #{_lambda_.1} parent=5 // pred_region
        %s191 = ssub.s32 %s12, 1
        // Predicated region
        $region13: #{_lambda_.1} parent=11 // pred_check
          %p192 = pneg %p45
        $region14: #{_lambda_.1} parent=11 // pred_check_branch
          %194 = sbr.rel (%p192) target = $region16
        $region15: #{_lambda_.1} parent=11 // pred_region
          %s196 = ssub.s32 16, 16
          %197 = vsyncadd [#allocation4], %s196
          %s199 = sshll.u32 %s0, 4
          %s200 = int_to_ptr.vmem [resolvable:$true] %s199
          %202 = dma.vmem_to_smem %s200, 16, [#allocation3], [#allocation4]
        $region16: #{_lambda_.1} parent=11 // pred_fallthru
          _
      $region12: #{_lambda_.1} parent=5 // pred_fallthru
        _
      %p203 = scmp.lt.s32.totalorder %s12, 2
      // Predicated region
      $region17: #{_lambda_.1} parent=5 // pred_check
        %p204 = pneg %p203
      $region18: #{_lambda_.1} parent=5 // pred_check_branch
        %206 = sbr.rel (%p204) target = $region20
      $region19: #{_lambda_.1} parent=5 // pred_region
        // Predicated region
        $region21: #{_lambda_.1} parent=19 // pred_check
          %p207 = pneg %p65
        $region22: #{_lambda_.1} parent=19 // pred_check_branch
          %209 = sbr.rel (%p207) target = $region24
        $region23: #{_lambda_.1} parent=19 // pred_region
          %p210 = scmp.lt.s32.totalorder %s19, 1
          %s211 = scalar_select %p210, %s19, 1
          %s212 = smul.addr %s211, 8
          %s213 = scalar_lea.vmem %s1, %s212
        $region24: #{_lambda_.1} parent=19 // pred_fallthru
          _
        // Predicated region
        $region25: #{_lambda_.1} parent=19 // pred_check
          %p214 = pneg %p91
        $region26: #{_lambda_.1} parent=19 // pred_check_branch
          %216 = sbr.rel (%p214) target = $region28
        $region27: #{_lambda_.1} parent=19 // pred_region
          %p217 = scmp.lt.s32.totalorder %s19, 1
          %s218 = scalar_select %p217, %s19, 1
          %s219 = smul.addr %s218, 8
          %s220 = scalar_lea.vmem %s2, %s219
        $region28: #{_lambda_.1} parent=19 // pred_fallthru
          _
        // Predicated region
        $region29: #{_lambda_.1} parent=19 // pred_check
          %p221 = pneg %p117
        $region30: #{_lambda_.1} parent=19 // pred_check_branch
          %223 = sbr.rel (%p221) target = $region32
        $region31: #{_lambda_.1} parent=19 // pred_region
          %p224 = scmp.lt.s32.totalorder %s19, 1
          %s225 = scalar_select %p224, %s19, 1
          %s226 = smul.addr %s225, 8
          %s227 = scalar_lea.vmem %s3, %s226
        $region32: #{_lambda_.1} parent=19 // pred_fallthru
          _
        // Predicated region
        $region33: #{_lambda_.1} parent=19 // pred_check
          %p228 = pneg %p143
        $region34: #{_lambda_.1} parent=19 // pred_check_branch
          %230 = sbr.rel (%p228) target = $region36
        $region35: #{_lambda_.1} parent=19 // pred_region
          %p231 = scmp.lt.s32.totalorder %s19, 1
          %s232 = scalar_select %p231, %s19, 1
          %s233 = smul.addr %s232, 8
          %s234 = scalar_lea.vmem %s4, %s233
        $region36: #{_lambda_.1} parent=19 // pred_fallthru
          _
      $region20: #{_lambda_.1} parent=5 // pred_fallthru
        _
      %p235 = scmp.le.s32.totalorder 1, %s12
      %p236 = scmp.lt.s32.totalorder %s12, 3
      %p237 = pnand %p235, %p236
      %p238 = pneg %p237
      // Predicated region
      $region37: #{_lambda_.1} parent=5 // pred_check
        _
      $region38: #{_lambda_.1} parent=5 // pred_check_branch
        %240 = sbr.rel (%p237) target = $region40
      $region39: #{_lambda_.1} parent=5 // pred_region
        %s241 = ssub.s32 %s12, 1
        // Predicated region
        $region41: #{_lambda_.1} parent=39 // pred_check
          %p242 = pneg %p45
        $region42: #{_lambda_.1} parent=39 // pred_check_branch
          %244 = sbr.rel (%p242) target = $region44
        $region43: #{_lambda_.1} parent=39 // pred_region
          %245 = dma.done [#allocation4], 16
        $region44: #{_lambda_.1} parent=39 // pred_fallthru
          _
        %246 = sfence
        %p247 = pneg %p45
        %p248 = pneg %p42
        %p249 = scmp.lt.s32.totalorder %s21, 1
        %s250 = scalar_select %p249, %s21, 1
        %s251 = smul.addr %s250, 8
        %s252 = scalar_lea.vmem %s1, %s251
        %p253 = pneg %p71
        %p254 = pneg %p68
        %p255 = scmp.lt.s32.totalorder %s21, 1
        %s256 = scalar_select %p255, %s21, 1
        %s257 = smul.addr %s256, 8
        %s258 = scalar_lea.vmem %s2, %s257
        %p259 = pneg %p97
        %p260 = pneg %p94
        %p261 = scmp.lt.s32.totalorder %s21, 1
        %s262 = scalar_select %p261, %s21, 1
        %s263 = smul.addr %s262, 8
        %s264 = scalar_lea.vmem %s3, %s263
        %p265 = pneg %p123
        %p266 = pneg %p120
        %p267 = scmp.lt.s32.totalorder %s21, 1
        %s268 = scalar_select %p267, %s21, 1
        %s269 = smul.addr %s268, 8
        %s270 = scalar_lea.vmem %s4, %s269
        %p271 = pneg %p149
        %p272 = pneg %p146
        %p273 = pneg %p177
        %p274 = pneg %p174
        %s275 = smul.u32 2, %s22
        %p276 = scmp.lt.s32.totalorder %s21, 1
        %s277 = scalar_select %p276, %s21, 1
        %p278 = scmp.lt.s32.totalorder %s275, 1
        %s279 = scalar_select %p278, %s275, 1
        %s280 = smul.addr %s279, 4
        %s281 = smul.addr %s277, 8
        %s282 = sadd.s32 %s280, %s281
        %s283 = smul.addr %s282, 8
        %s284 = scalar_lea.vmem %s5, %s283
        %p285 = scmp.lt.s32.totalorder %s21, 1
        %s286 = scalar_select %p285, %s21, 1
        %s287 = smul.addr %s286, 8
        %s288 = scalar_lea.vmem %s1, %s287
        %p289 = scmp.lt.s32.totalorder %s21, 1
        %s290 = scalar_select %p289, %s21, 1
        %s291 = smul.addr %s290, 8
        %s292 = scalar_lea.vmem %s2, %s291
        %p293 = scmp.lt.s32.totalorder %s21, 1
        %s294 = scalar_select %p293, %s21, 1
        %s295 = smul.addr %s294, 8
        %s296 = scalar_lea.vmem %s3, %s295
        %p297 = scmp.lt.s32.totalorder %s21, 1
        %s298 = scalar_select %p297, %s21, 1
        %s299 = smul.addr %s298, 8
        %s300 = scalar_lea.vmem %s4, %s299
        %s301 = smul.u32 2, %s22
        %p302 = scmp.lt.s32.totalorder %s21, 1
        %s303 = scalar_select %p302, %s21, 1
        %p304 = scmp.lt.s32.totalorder %s301, 1
        %s305 = scalar_select %p304, %s301, 1
        %s306 = smul.addr %s305, 4
        %s307 = smul.addr %s303, 8
        %s308 = sadd.s32 %s306, %s307
        %s309 = smul.addr %s308, 8
        %s310 = scalar_lea.vmem %s5, %s309
        %s311 = smul.u32 2, %s22
        %p312 = scmp.eq.s32.totalorder %s22, 0
        // Predicated region
        $region45: #{_lambda_.1} parent=39 // pred_check
          %p313 = pneg %p312
        $region46: #{_lambda_.1} parent=39 // pred_check_branch
          %315 = sbr.rel (%p313) target = $region48
        $region47: #{_lambda_.1} parent=39 // pred_region
          %v316 = vld [vmem:[%s288] sm:$0xff]
          %v317 = vand.u32 2147483647, %v316
          %v318 = vld [vmem:[%s292] sm:$0xff]
          %v319 = vand.u32 2147483647, %v318
          %v320 = vld [vmem:[%s296] sm:$0xff]
          %v321 = vand.u32 2147483647, %v320
          %v322 = vld [vmem:[%s300] sm:$0xff]
          %v323 = vand.u32 2147483647, %v322
          %v325 = vrot.slane %v317, 1
          %vm327 = vcmask 1046528
          %v328 = vsel %vm327, %v325, 0.0
          %v330 = vrot.slane %v319, 1
          %v332 = vsel %vm327, %v330, 0.0
          %333 = vrot.lane.b32.xlu0 %v317, 127
          %v334 = vpop.permute.xlu0 %333
          %vm336 = vcmask 1039360
          %v337 = vsel %vm336, %v334, 0.0
          %339 = vrot.lane.b32.xlu0 %v323, 127
          %v340 = vpop.permute.xlu0 %339
          %v342 = vsel %vm336, %v340, 0.0
          %344 = vrot.lane.b32.xlu0 %v328, 127
          %v345 = vpop.permute.xlu0 %344
          %v347 = vsel %vm336, %v345, 0.0
          %v348 = vmul.f32 %v319, %v319
          %v349 = vmul.f32 %v321, %v321
          %v350 = vmul.f32 %v323, %v323
          %v351 = vmul.f32 %v317, %v317
          %v352 = vadd.f32 %v351, %v348
          %v353 = vadd.f32 %v352, %v349
          %v354 = vadd.f32 %v353, %v350
          %v355 = vrsqrt.pop %v354
          %v356 = vmul.f32 %v354, %v355
          %vm357 = vcmp.eq.f32.partialorder %v354, inf
          %v358 = vsel %vm357, %v354, %v356
          %vm359 = vcmp.eq.f32.partialorder %v354, 0.0
          %v360 = vand.u32 %v354, 2147483648
          %v361 = vsel %vm359, %v360, %v358
          %v362 = vmul.f32 %v337, %v337
          %v363 = vadd.f32 %v362, %v348
          %v364 = vadd.f32 %v363, %v349
          %v365 = vmul.f32 %v342, %v342
          %v366 = vadd.f32 %v364, %v365
          %v367 = vrsqrt.pop %v366
          %v368 = vmul.f32 %v366, %v367
          %vm369 = vcmp.eq.f32.partialorder %v366, inf
          %v370 = vsel %vm369, %v366, %v368
          %vm371 = vcmp.eq.f32.partialorder %v366, 0.0
          %v372 = vand.u32 %v366, 2147483648
          %v373 = vsel %vm371, %v372, %v370
          %v374 = vmul.f32 %v328, %v328
          %v375 = vmul.f32 %v332, %v332
          %v376 = vadd.f32 %v374, %v375
          %v377 = vadd.f32 %v376, %v349
          %v378 = vadd.f32 %v377, %v350
          %v379 = vrsqrt.pop %v378
          %v380 = vmul.f32 %v378, %v379
          %vm381 = vcmp.eq.f32.partialorder %v378, inf
          %v382 = vsel %vm381, %v378, %v380
          %vm383 = vcmp.eq.f32.partialorder %v378, 0.0
          %v384 = vand.u32 %v378, 2147483648
          %v385 = vsel %vm383, %v384, %v382
          %v386 = vmul.f32 %v347, %v347
          %v387 = vadd.f32 %v386, %v375
          %v388 = vadd.f32 %v387, %v349
          %v389 = vadd.f32 %v388, %v365
          %v390 = vrsqrt.pop %v389
          %v391 = vmul.f32 %v389, %v390
          %vm392 = vcmp.eq.f32.partialorder %v389, inf
          %v393 = vsel %vm392, %v389, %v391
          %vm394 = vcmp.eq.f32.partialorder %v389, 0.0
          %v395 = vand.u32 %v389, 2147483648
          %v396 = vsel %vm394, %v395, %v393
          %v397 = vlaneseq
          %v398 = vshrl.u32 %v397, 7
          %v399 = vadd.s32 %v398, 8
          %v400 = vadd.s32 %v398, 16
          %v401 = vadd.s32 %v398, 24
          %v402 = vadd.s32 %v398, 32
          %v403 = vadd.s32 %v398, 40
          %v404 = vadd.s32 %v398, 48
          %v405 = vadd.s32 %v398, 56
          %v406 = vadd.s32 %v398, 64
          %v407 = vadd.s32 %v398, 72
          %v408 = vadd.s32 %v398, 80
          %v409 = vadd.s32 %v398, 88
          %v410 = vadd.s32 %v398, 96
          %v411 = vadd.s32 %v398, 104
          %v412 = vadd.s32 %v398, 112
          %v413 = vadd.s32 %v398, 120
          %v414 = vlaneseq
          %v415 = vand.u32 %v414, 127
          %v416 = vadd.s32 %v415, 128
          %v417 = vmul.u32 %v398, 2
          %v418 = vmul.u32 %v399, 2
          %v419 = vmul.u32 %v400, 2
          %v420 = vmul.u32 %v401, 2
          %v421 = vmul.u32 %v402, 2
          %v422 = vmul.u32 %v403, 2
          %v423 = vmul.u32 %v404, 2
          %v424 = vmul.u32 %v405, 2
          %v425 = vmul.u32 %v406, 2
          %v426 = vmul.u32 %v407, 2
          %v427 = vmul.u32 %v408, 2
          %v428 = vmul.u32 %v409, 2
          %v429 = vmul.u32 %v410, 2
          %v430 = vmul.u32 %v411, 2
          %v431 = vmul.u32 %v412, 2
          %v432 = vmul.u32 %v413, 2
          %vm433 = vcmp.eq.s32.totalorder %v415, %v417
          %vm434 = vcmp.eq.s32.totalorder %v416, %v417
          %vm435 = vcmp.eq.s32.totalorder %v415, %v418
          %vm436 = vcmp.eq.s32.totalorder %v416, %v418
          %vm437 = vcmp.eq.s32.totalorder %v415, %v419
          %vm438 = vcmp.eq.s32.totalorder %v416, %v419
          %vm439 = vcmp.eq.s32.totalorder %v415, %v420
          %vm440 = vcmp.eq.s32.totalorder %v416, %v420
          %vm441 = vcmp.eq.s32.totalorder %v415, %v421
          %vm442 = vcmp.eq.s32.totalorder %v416, %v421
          %vm443 = vcmp.eq.s32.totalorder %v415, %v422
          %vm444 = vcmp.eq.s32.totalorder %v416, %v422
          %vm445 = vcmp.eq.s32.totalorder %v415, %v423
          %vm446 = vcmp.eq.s32.totalorder %v416, %v423
          %vm447 = vcmp.eq.s32.totalorder %v415, %v424
          %vm448 = vcmp.eq.s32.totalorder %v416, %v424
          %vm449 = vcmp.eq.s32.totalorder %v415, %v425
          %vm450 = vcmp.eq.s32.totalorder %v416, %v425
          %vm451 = vcmp.eq.s32.totalorder %v415, %v426
          %vm452 = vcmp.eq.s32.totalorder %v416, %v426
          %vm453 = vcmp.eq.s32.totalorder %v415, %v427
          %vm454 = vcmp.eq.s32.totalorder %v416, %v427
          %vm455 = vcmp.eq.s32.totalorder %v415, %v428
          %vm456 = vcmp.eq.s32.totalorder %v416, %v428
          %vm457 = vcmp.eq.s32.totalorder %v415, %v429
          %vm458 = vcmp.eq.s32.totalorder %v416, %v429
          %vm459 = vcmp.eq.s32.totalorder %v415, %v430
          %vm460 = vcmp.eq.s32.totalorder %v416, %v430
          %vm461 = vcmp.eq.s32.totalorder %v415, %v431
          %vm462 = vcmp.eq.s32.totalorder %v416, %v431
          %vm463 = vcmp.eq.s32.totalorder %v415, %v432
          %vm464 = vcmp.eq.s32.totalorder %v416, %v432
          %v465 = vsel %vm433, 1, 0
          %v466 = vsel %vm434, 1, 0
          %v467 = vsel %vm435, 1, 0
          %v468 = vsel %vm436, 1, 0
          %v469 = vsel %vm437, 1, 0
          %v470 = vsel %vm438, 1, 0
          %v471 = vsel %vm439, 1, 0
          %v472 = vsel %vm440, 1, 0
          %v473 = vsel %vm441, 1, 0
          %v474 = vsel %vm442, 1, 0
          %v475 = vsel %vm443, 1, 0
          %v476 = vsel %vm444, 1, 0
          %v477 = vsel %vm445, 1, 0
          %v478 = vsel %vm446, 1, 0
          %v479 = vsel %vm447, 1, 0
          %v480 = vsel %vm448, 1, 0
          %v481 = vsel %vm449, 1, 0
          %v482 = vsel %vm450, 1, 0
          %v483 = vsel %vm451, 1, 0
          %v484 = vsel %vm452, 1, 0
          %v485 = vsel %vm453, 1, 0
          %v486 = vsel %vm454, 1, 0
          %v487 = vsel %vm455, 1, 0
          %v488 = vsel %vm456, 1, 0
          %v489 = vsel %vm457, 1, 0
          %v490 = vsel %vm458, 1, 0
          %v491 = vsel %vm459, 1, 0
          %v492 = vsel %vm460, 1, 0
          %v493 = vsel %vm461, 1, 0
          %v494 = vsel %vm462, 1, 0
          %v495 = vsel %vm463, 1, 0
          %v496 = vsel %vm464, 1, 0
          %v497 = vcvt.s32.f32 %v465
          %v498 = vcvt.s32.f32 %v466
          %v499 = vcvt.s32.f32 %v467
          %v500 = vcvt.s32.f32 %v468
          %v501 = vcvt.s32.f32 %v469
          %v502 = vcvt.s32.f32 %v470
          %v503 = vcvt.s32.f32 %v471
          %v504 = vcvt.s32.f32 %v472
          %v505 = vcvt.s32.f32 %v473
          %v506 = vcvt.s32.f32 %v474
          %v507 = vcvt.s32.f32 %v475
          %v508 = vcvt.s32.f32 %v476
          %v509 = vcvt.s32.f32 %v477
          %v510 = vcvt.s32.f32 %v478
          %v511 = vcvt.s32.f32 %v479
          %v512 = vcvt.s32.f32 %v480
          %v513 = vcvt.s32.f32 %v481
          %v514 = vcvt.s32.f32 %v482
          %v515 = vcvt.s32.f32 %v483
          %v516 = vcvt.s32.f32 %v484
          %v517 = vcvt.s32.f32 %v485
          %v518 = vcvt.s32.f32 %v486
          %v519 = vcvt.s32.f32 %v487
          %v520 = vcvt.s32.f32 %v488
          %v521 = vcvt.s32.f32 %v489
          %v522 = vcvt.s32.f32 %v490
          %v523 = vcvt.s32.f32 %v491
          %v524 = vcvt.s32.f32 %v492
          %v525 = vcvt.s32.f32 %v493
          %v526 = vcvt.s32.f32 %v494
          %v527 = vcvt.s32.f32 %v495
          %v528 = vcvt.s32.f32 %v496
          %v529 = vadd.s32 %v417, 1
          %v530 = vadd.s32 %v418, 1
          %v531 = vadd.s32 %v419, 1
          %v532 = vadd.s32 %v420, 1
          %v533 = vadd.s32 %v421, 1
          %v534 = vadd.s32 %v422, 1
          %v535 = vadd.s32 %v423, 1
          %v536 = vadd.s32 %v424, 1
          %v537 = vadd.s32 %v425, 1
          %v538 = vadd.s32 %v426, 1
          %v539 = vadd.s32 %v427, 1
          %v540 = vadd.s32 %v428, 1
          %v541 = vadd.s32 %v429, 1
          %v542 = vadd.s32 %v430, 1
          %v543 = vadd.s32 %v431, 1
          %v544 = vadd.s32 %v432, 1
          %vm545 = vcmp.eq.s32.totalorder %v415, %v529
          %vm546 = vcmp.eq.s32.totalorder %v416, %v529
          %vm547 = vcmp.eq.s32.totalorder %v415, %v530
          %vm548 = vcmp.eq.s32.totalorder %v416, %v530
          %vm549 = vcmp.eq.s32.totalorder %v415, %v531
          %vm550 = vcmp.eq.s32.totalorder %v416, %v531
          %vm551 = vcmp.eq.s32.totalorder %v415, %v532
          %vm552 = vcmp.eq.s32.totalorder %v416, %v532
          %vm553 = vcmp.eq.s32.totalorder %v415, %v533
          %vm554 = vcmp.eq.s32.totalorder %v416, %v533
          %vm555 = vcmp.eq.s32.totalorder %v415, %v534
          %vm556 = vcmp.eq.s32.totalorder %v416, %v534
          %vm557 = vcmp.eq.s32.totalorder %v415, %v535
          %vm558 = vcmp.eq.s32.totalorder %v416, %v535
          %vm559 = vcmp.eq.s32.totalorder %v415, %v536
          %vm560 = vcmp.eq.s32.totalorder %v416, %v536
          %vm561 = vcmp.eq.s32.totalorder %v415, %v537
          %vm562 = vcmp.eq.s32.totalorder %v416, %v537
          %vm563 = vcmp.eq.s32.totalorder %v415, %v538
          %vm564 = vcmp.eq.s32.totalorder %v416, %v538
          %vm565 = vcmp.eq.s32.totalorder %v415, %v539
          %vm566 = vcmp.eq.s32.totalorder %v416, %v539
          %vm567 = vcmp.eq.s32.totalorder %v415, %v540
          %vm568 = vcmp.eq.s32.totalorder %v416, %v540
          %vm569 = vcmp.eq.s32.totalorder %v415, %v541
          %vm570 = vcmp.eq.s32.totalorder %v416, %v541
          %vm571 = vcmp.eq.s32.totalorder %v415, %v542
          %vm572 = vcmp.eq.s32.totalorder %v416, %v542
          %vm573 = vcmp.eq.s32.totalorder %v415, %v543
          %vm574 = vcmp.eq.s32.totalorder %v416, %v543
          %vm575 = vcmp.eq.s32.totalorder %v415, %v544
          %vm576 = vcmp.eq.s32.totalorder %v416, %v544
          %v577 = vsel %vm545, 1, 0
          %v578 = vsel %vm546, 1, 0
          %v579 = vsel %vm547, 1, 0
          %v580 = vsel %vm548, 1, 0
          %v581 = vsel %vm549, 1, 0
          %v582 = vsel %vm550, 1, 0
          %v583 = vsel %vm551, 1, 0
          %v584 = vsel %vm552, 1, 0
          %v585 = vsel %vm553, 1, 0
          %v586 = vsel %vm554, 1, 0
          %v587 = vsel %vm555, 1, 0
          %v588 = vsel %vm556, 1, 0
          %v589 = vsel %vm557, 1, 0
          %v590 = vsel %vm558, 1, 0
          %v591 = vsel %vm559, 1, 0
          %v592 = vsel %vm560, 1, 0
          %v593 = vsel %vm561, 1, 0
          %v594 = vsel %vm562, 1, 0
          %v595 = vsel %vm563, 1, 0
          %v596 = vsel %vm564, 1, 0
          %v597 = vsel %vm565, 1, 0
          %v598 = vsel %vm566, 1, 0
          %v599 = vsel %vm567, 1, 0
          %v600 = vsel %vm568, 1, 0
          %v601 = vsel %vm569, 1, 0
          %v602 = vsel %vm570, 1, 0
          %v603 = vsel %vm571, 1, 0
          %v604 = vsel %vm572, 1, 0
          %v605 = vsel %vm573, 1, 0
          %v606 = vsel %vm574, 1, 0
          %v607 = vsel %vm575, 1, 0
          %v608 = vsel %vm576, 1, 0
          %v609 = vcvt.s32.f32 %v577
          %v610 = vcvt.s32.f32 %v578
          %v611 = vcvt.s32.f32 %v579
          %v612 = vcvt.s32.f32 %v580
          %v613 = vcvt.s32.f32 %v581
          %v614 = vcvt.s32.f32 %v582
          %v615 = vcvt.s32.f32 %v583
          %v616 = vcvt.s32.f32 %v584
          %v617 = vcvt.s32.f32 %v585
          %v618 = vcvt.s32.f32 %v586
          %v619 = vcvt.s32.f32 %v587
          %v620 = vcvt.s32.f32 %v588
          %v621 = vcvt.s32.f32 %v589
          %v622 = vcvt.s32.f32 %v590
          %v623 = vcvt.s32.f32 %v591
          %v624 = vcvt.s32.f32 %v592
          %v625 = vcvt.s32.f32 %v593
          %v626 = vcvt.s32.f32 %v594
          %v627 = vcvt.s32.f32 %v595
          %v628 = vcvt.s32.f32 %v596
          %v629 = vcvt.s32.f32 %v597
          %v630 = vcvt.s32.f32 %v598
          %v631 = vcvt.s32.f32 %v599
          %v632 = vcvt.s32.f32 %v600
          %v633 = vcvt.s32.f32 %v601
          %v634 = vcvt.s32.f32 %v602
          %v635 = vcvt.s32.f32 %v603
          %v636 = vcvt.s32.f32 %v604
          %v637 = vcvt.s32.f32 %v605
          %v638 = vcvt.s32.f32 %v606
          %v639 = vcvt.s32.f32 %v607
          %v640 = vcvt.s32.f32 %v608
          %641 = vmatprep.subr.mxu0 %v610
          %642 = vmatpush1.msra.mxu0 %v609
          %643 = vmatprep.subr.mxu0 %v612
          %644 = vmatpush1.msra.mxu0 %v611
          %645 = vmatprep.subr.mxu0 %v614
          %646 = vmatpush1.msra.mxu0 %v613
          %647 = vmatprep.subr.mxu0 %v616
          %648 = vmatpush1.msra.mxu0 %v615
          %649 = vmatprep.subr.mxu0 %v618
          %650 = vmatpush1.msra.mxu0 %v617
          %651 = vmatprep.subr.mxu0 %v620
          %652 = vmatpush1.msra.mxu0 %v619
          %653 = vmatprep.subr.mxu0 %v622
          %654 = vmatpush1.msra.mxu0 %v621
          %655 = vmatprep.subr.mxu0 %v624
          %656 = vmatpush1.msra.mxu0 %v623
          %657 = vmatprep.subr.mxu0 %v626
          %658 = vmatpush1.msra.mxu0 %v625
          %659 = vmatprep.subr.mxu0 %v628
          %660 = vmatpush1.msra.mxu0 %v627
          %661 = vmatprep.subr.mxu0 %v630
          %662 = vmatpush1.msra.mxu0 %v629
          %663 = vmatprep.subr.mxu0 %v632
          %664 = vmatpush1.msra.mxu0 %v631
          %665 = vmatprep.subr.mxu0 %v634
          %666 = vmatpush1.msra.mxu0 %v633
          %667 = vmatprep.subr.mxu0 %v636
          %668 = vmatpush1.msra.mxu0 %v635
          %669 = vmatprep.subr.mxu0 %v638
          %670 = vmatpush1.msra.mxu0 %v637
          %671 = vmatprep.subr.mxu0 %v640
          %672 = vmatpush1.msra.mxu0 %v639
          %673 = vmatprep.subr.mxu0 0.0
          %674 = vmatpush1.msra.mxu0 0.0
          %675 = vmatprep.subr.mxu0 0.0
          %676 = vmatpush1.msra.mxu0 0.0
          %677 = vmatprep.subr.mxu0 0.0
          %678 = vmatpush1.msra.mxu0 0.0
          %679 = vmatprep.subr.mxu0 0.0
          %680 = vmatpush1.msra.mxu0 0.0
          %681 = vmatprep.subr.mxu0 0.0
          %682 = vmatpush1.msra.mxu0 0.0
          %683 = vmatprep.subr.mxu0 0.0
          %684 = vmatpush1.msra.mxu0 0.0
          %685 = vmatprep.subr.mxu0 0.0
          %686 = vmatpush1.msra.mxu0 0.0
          %687 = vmatprep.subr.mxu0 0.0
          %688 = vmatpush1.msra.mxu0 0.0
          %689 = vmatprep.subr.mxu0 0.0
          %690 = vmatpush1.msra.mxu0 0.0
          %691 = vmatprep.subr.mxu0 0.0
          %692 = vmatpush1.msra.mxu0 0.0
          %693 = vmatprep.subr.mxu0 0.0
          %694 = vmatpush1.msra.mxu0 0.0
          %695 = vmatprep.subr.mxu0 0.0
          %696 = vmatpush1.msra.mxu0 0.0
          %697 = vmatprep.subr.mxu0 0.0
          %698 = vmatpush1.msra.mxu0 0.0
          %699 = vmatprep.subr.mxu0 0.0
          %700 = vmatpush1.msra.mxu0 0.0
          %701 = vmatprep.subr.mxu0 0.0
          %702 = vmatpush1.msra.mxu0 0.0
          %703 = vmatprep.subr.mxu0 0.0
          %704 = vmatpush1.msra.mxu0 0.0
          %705 = vmatprep.mubr.f32.mxu0 0.0
          %706 = vmatmul.mubr.f32.gmra.mrb[0].mxu0 %v373
          %v707 = vpop.f32.mrb[0].mxu0
          %v708 = vadd.f32 0.0, %v707
          %v709 = vpop.f32.mrb[0].mxu0
          %v710 = vadd.f32 0.0, %v709
          %711 = vdwg.mxu0
          %712 = vmatprep.subr.mxu0 %v498
          %713 = vmatpush1.msra.mxu0 %v497
          %714 = vmatprep.subr.mxu0 %v500
          %715 = vmatpush1.msra.mxu0 %v499
          %716 = vmatprep.subr.mxu0 %v502
          %717 = vmatpush1.msra.mxu0 %v501
          %718 = vmatprep.subr.mxu0 %v504
          %719 = vmatpush1.msra.mxu0 %v503
          %720 = vmatprep.subr.mxu0 %v506
          %721 = vmatpush1.msra.mxu0 %v505
          %722 = vmatprep.subr.mxu0 %v508
          %723 = vmatpush1.msra.mxu0 %v507
          %724 = vmatprep.subr.mxu0 %v510
          %725 = vmatpush1.msra.mxu0 %v509
          %726 = vmatprep.subr.mxu0 %v512
          %727 = vmatpush1.msra.mxu0 %v511
          %728 = vmatprep.subr.mxu0 %v514
          %729 = vmatpush1.msra.mxu0 %v513
          %730 = vmatprep.subr.mxu0 %v516
          %731 = vmatpush1.msra.mxu0 %v515
          %732 = vmatprep.subr.mxu0 %v518
          %733 = vmatpush1.msra.mxu0 %v517
          %734 = vmatprep.subr.mxu0 %v520
          %735 = vmatpush1.msra.mxu0 %v519
          %736 = vmatprep.subr.mxu0 %v522
          %737 = vmatpush1.msra.mxu0 %v521
          %738 = vmatprep.subr.mxu0 %v524
          %739 = vmatpush1.msra.mxu0 %v523
          %740 = vmatprep.subr.mxu0 %v526
          %741 = vmatpush1.msra.mxu0 %v525
          %742 = vmatprep.subr.mxu0 %v528
          %743 = vmatpush1.msra.mxu0 %v527
          %744 = vmatprep.subr.mxu0 0.0
          %745 = vmatpush1.msra.mxu0 0.0
          %746 = vmatprep.subr.mxu0 0.0
          %747 = vmatpush1.msra.mxu0 0.0
          %748 = vmatprep.subr.mxu0 0.0
          %749 = vmatpush1.msra.mxu0 0.0
          %750 = vmatprep.subr.mxu0 0.0
          %751 = vmatpush1.msra.mxu0 0.0
          %752 = vmatprep.subr.mxu0 0.0
          %753 = vmatpush1.msra.mxu0 0.0
          %754 = vmatprep.subr.mxu0 0.0
          %755 = vmatpush1.msra.mxu0 0.0
          %756 = vmatprep.subr.mxu0 0.0
          %757 = vmatpush1.msra.mxu0 0.0
          %758 = vmatprep.subr.mxu0 0.0
          %759 = vmatpush1.msra.mxu0 0.0
          %760 = vmatprep.subr.mxu0 0.0
          %761 = vmatpush1.msra.mxu0 0.0
          %762 = vmatprep.subr.mxu0 0.0
          %763 = vmatpush1.msra.mxu0 0.0
          %764 = vmatprep.subr.mxu0 0.0
          %765 = vmatpush1.msra.mxu0 0.0
          %766 = vmatprep.subr.mxu0 0.0
          %767 = vmatpush1.msra.mxu0 0.0
          %768 = vmatprep.subr.mxu0 0.0
          %769 = vmatpush1.msra.mxu0 0.0
          %770 = vmatprep.subr.mxu0 0.0
          %771 = vmatpush1.msra.mxu0 0.0
          %772 = vmatprep.subr.mxu0 0.0
          %773 = vmatpush1.msra.mxu0 0.0
          %774 = vmatprep.subr.mxu0 0.0
          %775 = vmatpush1.msra.mxu0 0.0
          %776 = vmatprep.mubr.f32.mxu0 0.0
          %777 = vmatmul.mubr.f32.gmra.mrb[0].mxu0 %v361
          %v778 = vpop.f32.mrb[0].mxu0
          %v779 = vadd.f32 %v708, %v778
          %v780 = vpop.f32.mrb[0].mxu0
          %v781 = vadd.f32 %v710, %v780
          %782 = vdwg.mxu0
          %783 = vmatprep.subr.mxu0 %v610
          %784 = vmatpush1.msra.mxu0 %v609
          %785 = vmatprep.subr.mxu0 %v612
          %786 = vmatpush1.msra.mxu0 %v611
          %787 = vmatprep.subr.mxu0 %v614
          %788 = vmatpush1.msra.mxu0 %v613
          %789 = vmatprep.subr.mxu0 %v616
          %790 = vmatpush1.msra.mxu0 %v615
          %791 = vmatprep.subr.mxu0 %v618
          %792 = vmatpush1.msra.mxu0 %v617
          %793 = vmatprep.subr.mxu0 %v620
          %794 = vmatpush1.msra.mxu0 %v619
          %795 = vmatprep.subr.mxu0 %v622
          %796 = vmatpush1.msra.mxu0 %v621
          %797 = vmatprep.subr.mxu0 %v624
          %798 = vmatpush1.msra.mxu0 %v623
          %799 = vmatprep.subr.mxu0 %v626
          %800 = vmatpush1.msra.mxu0 %v625
          %801 = vmatprep.subr.mxu0 %v628
          %802 = vmatpush1.msra.mxu0 %v627
          %803 = vmatprep.subr.mxu0 %v630
          %804 = vmatpush1.msra.mxu0 %v629
          %805 = vmatprep.subr.mxu0 %v632
          %806 = vmatpush1.msra.mxu0 %v631
          %807 = vmatprep.subr.mxu0 %v634
          %808 = vmatpush1.msra.mxu0 %v633
          %809 = vmatprep.subr.mxu0 %v636
          %810 = vmatpush1.msra.mxu0 %v635
          %811 = vmatprep.subr.mxu0 %v638
          %812 = vmatpush1.msra.mxu0 %v637
          %813 = vmatprep.subr.mxu0 %v640
          %814 = vmatpush1.msra.mxu0 %v639
          %815 = vmatprep.subr.mxu0 0.0
          %816 = vmatpush1.msra.mxu0 0.0
          %817 = vmatprep.subr.mxu0 0.0
          %818 = vmatpush1.msra.mxu0 0.0
          %819 = vmatprep.subr.mxu0 0.0
          %820 = vmatpush1.msra.mxu0 0.0
          %821 = vmatprep.subr.mxu0 0.0
          %822 = vmatpush1.msra.mxu0 0.0
          %823 = vmatprep.subr.mxu0 0.0
          %824 = vmatpush1.msra.mxu0 0.0
          %825 = vmatprep.subr.mxu0 0.0
          %826 = vmatpush1.msra.mxu0 0.0
          %827 = vmatprep.subr.mxu0 0.0
          %828 = vmatpush1.msra.mxu0 0.0
          %829 = vmatprep.subr.mxu0 0.0
          %830 = vmatpush1.msra.mxu0 0.0
          %831 = vmatprep.subr.mxu0 0.0
          %832 = vmatpush1.msra.mxu0 0.0
          %833 = vmatprep.subr.mxu0 0.0
          %834 = vmatpush1.msra.mxu0 0.0
          %835 = vmatprep.subr.mxu0 0.0
          %836 = vmatpush1.msra.mxu0 0.0
          %837 = vmatprep.subr.mxu0 0.0
          %838 = vmatpush1.msra.mxu0 0.0
          %839 = vmatprep.subr.mxu0 0.0
          %840 = vmatpush1.msra.mxu0 0.0
          %841 = vmatprep.subr.mxu0 0.0
          %842 = vmatpush1.msra.mxu0 0.0
          %843 = vmatprep.subr.mxu0 0.0
          %844 = vmatpush1.msra.mxu0 0.0
          %845 = vmatprep.subr.mxu0 0.0
          %846 = vmatpush1.msra.mxu0 0.0
          %847 = vmatprep.mubr.f32.mxu0 0.0
          %848 = vmatmul.mubr.f32.gmra.mrb[0].mxu0 %v396
          %v849 = vpop.f32.mrb[0].mxu0
          %v850 = vadd.f32 0.0, %v849
          %v851 = vpop.f32.mrb[0].mxu0
          %v852 = vadd.f32 0.0, %v851
          %853 = vdwg.mxu0
          %854 = vmatprep.subr.mxu0 %v498
          %855 = vmatpush1.msra.mxu0 %v497
          %856 = vmatprep.subr.mxu0 %v500
          %857 = vmatpush1.msra.mxu0 %v499
          %858 = vmatprep.subr.mxu0 %v502
          %859 = vmatpush1.msra.mxu0 %v501
          %860 = vmatprep.subr.mxu0 %v504
          %861 = vmatpush1.msra.mxu0 %v503
          %862 = vmatprep.subr.mxu0 %v506
          %863 = vmatpush1.msra.mxu0 %v505
          %864 = vmatprep.subr.mxu0 %v508
          %865 = vmatpush1.msra.mxu0 %v507
          %866 = vmatprep.subr.mxu0 %v510
          %867 = vmatpush1.msra.mxu0 %v509
          %868 = vmatprep.subr.mxu0 %v512
          %869 = vmatpush1.msra.mxu0 %v511
          %870 = vmatprep.subr.mxu0 %v514
          %871 = vmatpush1.msra.mxu0 %v513
          %872 = vmatprep.subr.mxu0 %v516
          %873 = vmatpush1.msra.mxu0 %v515
          %874 = vmatprep.subr.mxu0 %v518
          %875 = vmatpush1.msra.mxu0 %v517
          %876 = vmatprep.subr.mxu0 %v520
          %877 = vmatpush1.msra.mxu0 %v519
          %878 = vmatprep.subr.mxu0 %v522
          %879 = vmatpush1.msra.mxu0 %v521
          %880 = vmatprep.subr.mxu0 %v524
          %881 = vmatpush1.msra.mxu0 %v523
          %882 = vmatprep.subr.mxu0 %v526
          %883 = vmatpush1.msra.mxu0 %v525
          %884 = vmatprep.subr.mxu0 %v528
          %885 = vmatpush1.msra.mxu0 %v527
          %886 = vmatprep.subr.mxu0 0.0
          %887 = vmatpush1.msra.mxu0 0.0
          %888 = vmatprep.subr.mxu0 0.0
          %889 = vmatpush1.msra.mxu0 0.0
          %890 = vmatprep.subr.mxu0 0.0
          %891 = vmatpush1.msra.mxu0 0.0
          %892 = vmatprep.subr.mxu0 0.0
          %893 = vmatpush1.msra.mxu0 0.0
          %894 = vmatprep.subr.mxu0 0.0
          %895 = vmatpush1.msra.mxu0 0.0
          %896 = vmatprep.subr.mxu0 0.0
          %897 = vmatpush1.msra.mxu0 0.0
          %898 = vmatprep.subr.mxu0 0.0
          %899 = vmatpush1.msra.mxu0 0.0
          %900 = vmatprep.subr.mxu0 0.0
          %901 = vmatpush1.msra.mxu0 0.0
          %902 = vmatprep.subr.mxu0 0.0
          %903 = vmatpush1.msra.mxu0 0.0
          %904 = vmatprep.subr.mxu0 0.0
          %905 = vmatpush1.msra.mxu0 0.0
          %906 = vmatprep.subr.mxu0 0.0
          %907 = vmatpush1.msra.mxu0 0.0
          %908 = vmatprep.subr.mxu0 0.0
          %909 = vmatpush1.msra.mxu0 0.0
          %910 = vmatprep.subr.mxu0 0.0
          %911 = vmatpush1.msra.mxu0 0.0
          %912 = vmatprep.subr.mxu0 0.0
          %913 = vmatpush1.msra.mxu0 0.0
          %914 = vmatprep.subr.mxu0 0.0
          %915 = vmatpush1.msra.mxu0 0.0
          %916 = vmatprep.subr.mxu0 0.0
          %917 = vmatpush1.msra.mxu0 0.0
          %918 = vmatprep.mubr.f32.mxu0 0.0
          %919 = vmatmul.mubr.f32.gmra.mrb[0].mxu0 %v385
          %v920 = vpop.f32.mrb[0].mxu0
          %v921 = vadd.f32 %v850, %v920
          %v922 = vpop.f32.mrb[0].mxu0
          %v923 = vadd.f32 %v852, %v922
          %924 = vdwg.mxu0
          %925 = vst [vmem:[#allocation2] sm:$0xff] %v779
          %926 = vst [vmem:[#allocation2 + $0x8] sm:$0xff] %v781
          %927 = vst [vmem:[#allocation2 + $0x10] sm:$0xff] %v921
          %928 = vst [vmem:[#allocation2 + $0x18] sm:$0xff] %v923
        $region48: #{_lambda_.1} parent=39 // pred_fallthru
          _
        %s929 = smul.u32 %s22, 2
        %s930 = sld [smem:[#allocation3 + %s929]]
        %s931 = smul.f32 %s930, 0.5
        %v932 = vld [vmem:[#allocation2] sm:$0xff]
        %v933 = vld [vmem:[#allocation2 + $0x8] sm:$0xff]
        %v934 = vld [vmem:[#allocation2 + $0x10] sm:$0xff]
        %v935 = vld [vmem:[#allocation2 + $0x18] sm:$0xff]
        %v936 = vstv %s931
        %v937 = vmul.f32 %v936, %v932
        %v938 = vmul.f32 %v936, %v933
        %v939 = vmul.f32 %v936, %v934
        %v940 = vmul.f32 %v936, %v935
        %941 = vst [vmem:[%s310] sm:$0xff] %v937
        %942 = vst [vmem:[%s310 + $0x8] sm:$0xff] %v938
        %943 = vst [vmem:[%s310 + $0x10] sm:$0xff] %v939
        %944 = vst [vmem:[%s310 + $0x18] sm:$0xff] %v940
        %s945 = sadd.s32 %s929, 1
        %s946 = sld [smem:[#allocation3 + %s945]]
        %s947 = smul.f32 %s946, 0.5
        %v948 = vld [vmem:[#allocation2] sm:$0xff]
        %v949 = vld [vmem:[#allocation2 + $0x8] sm:$0xff]
        %v950 = vld [vmem:[#allocation2 + $0x10] sm:$0xff]
        %v951 = vld [vmem:[#allocation2 + $0x18] sm:$0xff]
        %v952 = vstv %s947
        %v953 = vmul.f32 %v952, %v948
        %v954 = vmul.f32 %v952, %v949
        %v955 = vmul.f32 %v952, %v950
        %v956 = vmul.f32 %v952, %v951
        %s957 = scalar_lea.vmem %s310, 32
        %958 = vst [vmem:[%s957] sm:$0xff] %v953
        %959 = vst [vmem:[%s957 + $0x8] sm:$0xff] %v954
        %960 = vst [vmem:[%s957 + $0x10] sm:$0xff] %v955
        %961 = vst [vmem:[%s957 + $0x18] sm:$0xff] %v956
        %s962 = smul.u32 2, %s22
        %p963 = scmp.lt.s32.totalorder %s21, 1
        %s964 = scalar_select %p963, %s21, 1
        %p965 = scmp.lt.s32.totalorder %s962, 1
        %s966 = scalar_select %p965, %s962, 1
        %s967 = smul.addr %s966, 4
        %s968 = smul.addr %s964, 8
        %s969 = sadd.s32 %s967, %s968
        %s970 = smul.addr %s969, 8
        %s971 = scalar_lea.vmem %s5, %s970
        // Predicated region
        $region49: #{_lambda_.1} parent=39 // pred_check
          %p972 = pneg %p174
        $region50: #{_lambda_.1} parent=39 // pred_check_branch
          %974 = sbr.rel (%p972) target = $region52
        $region51: #{_lambda_.1} parent=39 // pred_region
          %s975 = smul.u32 2, %s22
        $region52: #{_lambda_.1} parent=39 // pred_fallthru
          _
      $region40: #{_lambda_.1} parent=5 // pred_fallthru
        _
      %p976 = scmp.le.s32.totalorder 2, %s12
      // Predicated region
      $region53: #{_lambda_.1} parent=5 // pred_check
        %p977 = pneg %p976
      $region54: #{_lambda_.1} parent=5 // pred_check_branch
        %979 = sbr.rel (%p977) target = $region56
      $region55: #{_lambda_.1} parent=5 // pred_region
        %s980 = ssub.s32 %s12, 2
        // Predicated region
        $region57: #{_lambda_.1} parent=55 // pred_check
          %p981 = pneg %p180
        $region58: #{_lambda_.1} parent=55 // pred_check_branch
          %983 = sbr.rel (%p981) target = $region60
        $region59: #{_lambda_.1} parent=55 // pred_region
          %s984 = smul.u32 2, %s24
          %p985 = scmp.lt.s32.totalorder %s23, 1
          %s986 = scalar_select %p985, %s23, 1
          %p987 = scmp.lt.s32.totalorder %s984, 1
          %s988 = scalar_select %p987, %s984, 1
          %s989 = smul.addr %s988, 4
          %s990 = smul.addr %s986, 8
          %s991 = sadd.s32 %s989, %s990
          %s992 = smul.addr %s991, 8
          %s993 = scalar_lea.vmem %s5, %s992
        $region60: #{_lambda_.1} parent=55 // pred_fallthru
          _
      $region56: #{_lambda_.1} parent=5 // pred_fallthru
        _
    $region6: #{_lambda_.1} parent=1 // loop_footer
      %s16 = sadd.s32 1, %s12
    $region7: #{_lambda_.1} parent=1 // loop_footer_branch
      %11 = sbr.rel target = $region3
    $region8: #{_lambda_.1} parent=1 // loop_exit
      _
    %994 = vsyncpa [#allocation4], 1
    %s995 = scalar_lea.sflag [#allocation4], 1
    %996 = vsyncpa %s995, 1

</llo_original>
